<compile_context>
chip_gen: v7x
topology: tpu7x:2x2x1
jax: 0.10.0
libtpu: 0.0.40
codegen_flags: <defaults>
</compile_context>

<pallas_src>
import functools

import jax
import jax.numpy as jnp
from jax import lax
from jax.experimental import pallas as pl
from jax.experimental.pallas import tpu as pltpu


def _round_up(n, m):
    return ((n + m - 1) // m) * m


# ----------------------------------------------------------------------------
# Stage 1: projection  h = (feat @ W) * cu   (tiny; tiled only over src nodes)
# ----------------------------------------------------------------------------
def _project_kernel(feat_ref, w_ref, cu_ref, h_ref):
    h = jnp.dot(feat_ref[...], w_ref[...], preferred_element_type=jnp.float32)
    # TODO(synk): dropout(cu) with p > 0 would need pltpu.prng_seed/prng_random_bits;
    # p = 0 (module default / inference) -> identity.
    h_ref[...] = (h * cu_ref[...]).astype(h_ref.dtype)


# ----------------------------------------------------------------------------
# Stage 2: aggregation  out = (A @ h) * cv   (tiled dst x src, f32 accumulator)
# ----------------------------------------------------------------------------
def _aggregate_kernel(adj_ref, h_ref, cv_ref, out_ref, acc_ref, *,
                      t_src, n_src, src_ragged, h_resident):
    k = pl.program_id(1)

    @pl.when(k == 0)
    def _():
        acc_ref[...] = jnp.zeros_like(acc_ref)

    a = adj_ref[...]
    if src_ragged:
        # The last src tile reads past n_src columns of the UNPADDED adjacency
        # (garbage/stale VMEM).  Zero those columns so they contribute exactly 0
        # against the zero-padded h rows (which are exact zeros from stage 1).
        col = k * t_src + lax.broadcasted_iota(jnp.int32, (1, t_src), 1)
        a = jnp.where(col < n_src, a, 0)

    if h_resident:
        # h is fully VMEM-resident (constant-index BlockSpec); slice the k-th chunk.
        start = pl.multiple_of(k * t_src, t_src)
        hk = h_ref[pl.ds(start, t_src), :]
    else:
        hk = h_ref[...]

    acc_ref[...] += jnp.dot(a, hk, preferred_element_type=jnp.float32)

    @pl.when(k == pl.num_programs(1) - 1)
    def _():
        # cv epilogue on the f32 accumulator (cheap VPU filler under the DMA-bound loop).
        out_ref[...] = (acc_ref[...] * cv_ref[...]).astype(out_ref.dtype)


def influence_graph_conv(feat, weight, adj, cu, cv, *,
                         agg_dtype=None, tile_dst=1024, tile_src=1024,
                         h_resident_max_bytes=4 << 20,
                         vmem_budget_bytes=44 << 20):
    """Fused InfluenceGraphConv forward on TPU.

    adj is streamed as-is (no pad, no cast): its storage dtype is the dtype fed
    to the MXU (f32 accumulation regardless).  Store/pass adj in bf16 (or fp8 on
    v7x, int8 on v5e/v6e with a caller-side scale) to halve/quarter the dominant
    HBM stream.  If agg_dtype is given and differs from adj.dtype, a full cast
    pre-pass over adj is performed (avoid on large graphs).
    """
    n_src, f_in = feat.shape
    f_out = weight.shape[1]
    n_dst, n_src_a = adj.shape
    assert n_src_a == n_src
    assert cu.shape == (n_src, 1) and cv.shape == (n_dst, 1)

    out_dtype = feat.dtype
    if agg_dtype is None:
        agg_dtype = adj.dtype
    if adj.dtype != agg_dtype:
        # NOTE: full HBM read+write pre-pass over the dominant stream; prefer to
        # store adj in agg_dtype instead.
        adj = adj.astype(agg_dtype)

    adj_bytes = jnp.dtype(agg_dtype).itemsize
    agg_bytes = adj_bytes
    out_bytes = jnp.dtype(out_dtype).itemsize

    # Lane-dense output / full MXU tiles: pad F_out to a multiple of 128.
    f_out_pad = _round_up(f_out, 128)

    # ---- tile selection -----------------------------------------------------
    # Blocks must have last dim % 128 == 0 (or equal the full dim) and
    # second-to-last % 8 == 0 (or equal the full dim).
    t_src = n_src if n_src <= tile_src else max(128, (tile_src // 128) * 128)
    t_dst = n_dst if n_dst <= tile_dst else max(8, (tile_dst // 8) * 8)

    # v7x has 2 TensorCores: give the "parallel" dst axis >= 2 tiles when there
    # is enough work, so both cores get a shard.
    if _round_up(n_dst, t_dst) // t_dst < 2 and n_dst >= 512:
        t_dst = _round_up(-(-n_dst // 2), 8)

    def _vmem_estimate(td, ts, resident):
        h_rows = _round_up(n_src, ts) if resident else ts
        return (2 * td * ts * adj_bytes                 # double-buffered adj stream
                + 2 * h_rows * f_out_pad * agg_bytes    # h (tiled or resident)
                + 2 * td * f_out_pad * out_bytes        # output block
                + td * f_out_pad * 4)                   # f32 accumulator

    # Shrink tiles until the double-buffered working set fits comfortably in
    # VMEM (v7x: 64 MiB/TC; leave headroom for internal scratch).
    for _ in range(16):
        if _vmem_estimate(t_dst, t_src, False) <= vmem_budget_bytes:
            break
        if t_src > 128 and t_src >= t_dst:
            t_src = max(128, ((t_src // 2) // 128) * 128)
        elif t_dst > 128:
            t_dst = max(128, ((t_dst // 2) // 8) * 8)
        else:
            break

    n_src_pad = _round_up(n_src, t_src)
    n_dst_pad = _round_up(n_dst, t_dst)
    k_steps = n_src_pad // t_src
    i_steps = n_dst_pad // t_dst
    src_ragged = (n_src % t_src) != 0

    # Keep the whole projected h VMEM-resident when small (kills the per-dst-tile
    # h re-stream from HBM).
    h_total_bytes = n_src_pad * f_out_pad * agg_bytes
    h_resident = (k_steps > 1
                  and h_total_bytes <= h_resident_max_bytes
                  and _vmem_estimate(t_dst, t_src, True) <= vmem_budget_bytes)

    # Cheap pads only on the SMALL arrays (feat/cu/cv/weight); adj stays untouched.
    feat_p = feat if n_src_pad == n_src else jnp.pad(feat, ((0, n_src_pad - n_src), (0, 0)))
    cu_p = cu if n_src_pad == n_src else jnp.pad(cu, ((0, n_src_pad - n_src), (0, 0)))
    cv_p = cv if n_dst_pad == n_dst else jnp.pad(cv, ((0, n_dst_pad - n_dst), (0, 0)))
    w_p = weight if f_out_pad == f_out else jnp.pad(weight, ((0, 0), (0, f_out_pad - f_out)))

    # ---- Stage 1: h = (feat @ W) * cu (pad rows of feat/cu are zero -> h pad rows
    # are exact zeros, which the ragged stage-2 tiles rely on).
    h = pl.pallas_call(
        _project_kernel,
        out_shape=jax.ShapeDtypeStruct((n_src_pad, f_out_pad), agg_dtype),
        grid=(n_src_pad // t_src,),
        in_specs=[
            pl.BlockSpec((t_src, f_in), lambda i: (i, 0)),        # feat tile
            pl.BlockSpec((f_in, f_out_pad), lambda i: (0, 0)),    # full weight
            pl.BlockSpec((t_src, 1), lambda i: (i, 0)),           # cu tile
        ],
        out_specs=pl.BlockSpec((t_src, f_out_pad), lambda i: (i, 0)),
        compiler_params=pltpu.CompilerParams(
            dimension_semantics=("parallel",),
            vmem_limit_bytes=64 * 1024 * 1024),
    )(feat_p, w_p, cu_p)

    # ---- Stage 2: out = (A @ h) * cv with tiled dst x src grid + VMEM f32 accumulator.
    if h_resident:
        h_spec = pl.BlockSpec((n_src_pad, f_out_pad), lambda i, k: (0, 0))  # resident
    else:
        h_spec = pl.BlockSpec((t_src, f_out_pad), lambda i, k: (k, 0))      # streamed

    kernel = functools.partial(_aggregate_kernel, t_src=t_src, n_src=n_src,
                               src_ragged=src_ragged, h_resident=h_resident)

    flops = 2 * n_dst_pad * n_src_pad * f_out_pad
    h_stream_bytes = h_total_bytes * (1 if h_resident else i_steps)
    bytes_accessed = (n_dst * n_src * adj_bytes
                      + h_stream_bytes
                      + n_dst_pad * f_out_pad * out_bytes)

    out_p = pl.pallas_call(
        kernel,
        out_shape=jax.ShapeDtypeStruct((n_dst_pad, f_out_pad), out_dtype),
        grid=(i_steps, k_steps),
        in_specs=[
            pl.BlockSpec((t_dst, t_src), lambda i, k: (i, k)),   # adj tile (dominant stream)
            h_spec,                                              # projected features
            pl.BlockSpec((t_dst, 1), lambda i, k: (i, 0)),       # cv tile
        ],
        out_specs=pl.BlockSpec((t_dst, f_out_pad), lambda i, k: (i, 0)),
        scratch_shapes=[pltpu.VMEM((t_dst, f_out_pad), jnp.float32)],
        compiler_params=pltpu.CompilerParams(
            dimension_semantics=("parallel", "arbitrary"),
            vmem_limit_bytes=64 * 1024 * 1024),
        cost_estimate=pl.CostEstimate(flops=flops, transcendentals=0,
                                      bytes_accessed=bytes_accessed),
    )(adj, h, cv_p)

    return out_p[:n_dst, :f_out]


def influence_graph_conv_ref(feat, weight, adj, cu, cv):
    """Pure-JAX reference of the PyTorch/DGL forward (dtype-matched to adj)."""
    h = ((feat @ weight) * cu).astype(adj.dtype)
    agg = jnp.dot(adj, h, preferred_element_type=jnp.float32)
    return (agg * cv).astype(feat.dtype)


if __name__ == "__main__":
    key = jax.random.PRNGKey(0)
    k_feat, k_w, k_adj, k_mask, k_cu, k_cv = jax.random.split(key, 6)

    # Small homogeneous graph: N = 64 nodes, in_features = 32, out_features = 16.
    N, F_IN, F_OUT = 64, 32, 16

    feat = jax.random.normal(k_feat, (N, F_IN), dtype=jnp.float32)

    # Deterministic xavier_uniform_ init for self.weight (in_features, out_features).
    bound = (6.0 / (F_IN + F_OUT)) ** 0.5
    weight = jax.random.uniform(
        k_w, (F_IN, F_OUT), dtype=jnp.float32, minval=-bound, maxval=bound)

    # Dense weighted adjacency: ~20% random edges with uniform edge weights.
    edge_mask = (jax.random.uniform(k_mask, (N, N)) < 0.2).astype(jnp.float32)
    edge_w = jax.random.uniform(k_adj, (N, N), dtype=jnp.float32)
    adj = edge_mask * edge_w                           # adj[v, u] = w_{u->v}

    # Per-node influence coefficients cu (src) and cv (dst), shape (N, 1).
    cu = jax.random.uniform(k_cu, (N, 1), dtype=jnp.float32, minval=0.1, maxval=1.0)
    cv = jax.random.uniform(k_cv, (N, 1), dtype=jnp.float32, minval=0.1, maxval=1.0)

    # f32 path (single tile; tight numerical check).
    out = jax.block_until_ready(influence_graph_conv(feat, weight, adj, cu, cv))
    ref = influence_graph_conv_ref(feat, weight, adj, cu, cv)
    assert out.shape == (N, F_OUT)
    assert jnp.allclose(out, ref, atol=1e-4, rtol=1e-4), "f32 mismatch vs reference"

    # bf16 adjacency stream: adj stored in bf16 -> no wrapper pre-pass, half HBM traffic.
    adj_bf16 = adj.astype(jnp.bfloat16)
    out_bf16 = jax.block_until_ready(influence_graph_conv(feat, weight, adj_bf16, cu, cv))
    ref_bf16 = influence_graph_conv_ref(feat, weight, adj_bf16, cu, cv)
    assert out_bf16.shape == (N, F_OUT)
    assert jnp.allclose(out_bf16, ref_bf16, atol=5e-2, rtol=5e-2), \
        "bf16 mismatch vs dtype-matched reference"

    # Ragged / multi-tile path: exercises in-kernel src-column masking, resident-h
    # pl.ds slicing and dst-row padding (sliced off), with small forced tiles.
    N_SRC2, N_DST2 = 300, 200
    k_f2, k_a2, k_w2, k_c2 = jax.random.split(jax.random.PRNGKey(1), 4)
    feat2 = jax.random.normal(k_f2, (N_SRC2, F_IN), dtype=jnp.float32)
    adj2 = ((jax.random.uniform(k_a2, (N_DST2, N_SRC2)) < 0.2).astype(jnp.float32)
            * jax.random.uniform(k_w2, (N_DST2, N_SRC2), dtype=jnp.float32))
    cu2 = jax.random.uniform(k_c2, (N_SRC2, 1), dtype=jnp.float32, minval=0.1, maxval=1.0)
    cv2 = jax.random.uniform(k_c2, (N_DST2, 1), dtype=jnp.float32, minval=0.1, maxval=1.0)
    out2 = jax.block_until_ready(
        influence_graph_conv(feat2, weight, adj2, cu2, cv2, tile_dst=128, tile_src=128))
    ref2 = influence_graph_conv_ref(feat2, weight, adj2, cu2, cv2)
    assert out2.shape == (N_DST2, F_OUT)
    assert jnp.allclose(out2, ref2, atol=2e-3, rtol=2e-3), "ragged-tile mismatch vs reference"

    print("KERNEL_OK")
</pallas_src>

<mosaic_0001>
module attributes {stable_mosaic.version = 11 : i64} {
  func.func @_project_kernel(%arg0: i32, %arg1: memref<64x32xf32, #tpu.memory_space<vmem>>, %arg2: memref<32x128xf32, #tpu.memory_space<vmem>>, %arg3: memref<64x1xf32, #tpu.memory_space<vmem>>, %arg4: memref<64x128xf32, #tpu.memory_space<vmem>>) attributes {dimension_semantics = [#tpu.dimension_semantics<parallel>], iteration_bounds = array<i64: 1>, scalar_prefetch = 0 : i64, scratch_operands = 0 : i64, tpu.core_type = #tpu.core_type<tc>, window_params = [{transform_indices = @transform_0, window_bounds = array<i64: 64, 32>}, {pipeline_mode = #tpu.pipeline_mode<synchronous>, transform_indices = @transform_1, window_bounds = array<i64: 32, 128>}, {transform_indices = @transform_2, window_bounds = array<i64: 64, 1>}, {transform_indices = @transform_3, window_bounds = array<i64: 64, 128>}]} {
    %c0 = arith.constant 0 : index
    %c0_0 = arith.constant 0 : index
    %0 = vector.load %arg1[%c0, %c0_0] : memref<64x32xf32, #tpu.memory_space<vmem>>, vector<64x32xf32>
    %c0_1 = arith.constant 0 : index
    %c0_2 = arith.constant 0 : index
    %1 = vector.load %arg2[%c0_1, %c0_2] : memref<32x128xf32, #tpu.memory_space<vmem>>, vector<32x128xf32>
    %cst = arith.constant dense<0.000000e+00> : vector<64x128xf32>
    %2 = tpu.matmul %0, %1, %cst {dimension_numbers = #tpu.dot_dimension_numbers<[1], [0], [0], [1], [0, 0, 1, 1], [], []>} : vector<64x32xf32>, vector<32x128xf32>, vector<64x128xf32> -> vector<64x128xf32>
    %c0_3 = arith.constant 0 : index
    %c0_4 = arith.constant 0 : index
    %3 = vector.load %arg3[%c0_3, %c0_4] : memref<64x1xf32, #tpu.memory_space<vmem>>, vector<64x1xf32>
    %4 = vector.broadcast %3 : vector<64x1xf32> to vector<64x128xf32>
    %5 = arith.mulf %2, %4 : vector<64x128xf32>
    %c0_5 = arith.constant 0 : index
    %c0_6 = arith.constant 0 : index
    %6 = vector.load %arg4[%c0_5, %c0_6] : memref<64x128xf32, #tpu.memory_space<vmem>>, vector<64x128xf32>
    tpu.vector_store %arg4[%c0_5, %c0_6], %5 {strides = array<i32>} : memref<64x128xf32, #tpu.memory_space<vmem>>, vector<64x128xf32>,
    return
  }
  func.func @transform_0(%arg0: i32) -> (i32, i32) {
    %c0_i32 = arith.constant 0 : i32
    %c0_i32_0 = arith.constant 0 : i32
    return %arg0, %c0_i32 : i32, i32
  }
  func.func @transform_1(%arg0: i32) -> (i32, i32) {
    %c0_i32 = arith.constant 0 : i32
    %c0_i32_0 = arith.constant 0 : i32
    %c0_i32_1 = arith.constant 0 : i32
    return %c0_i32, %c0_i32_0 : i32, i32
  }
  func.func @transform_2(%arg0: i32) -> (i32, i32) {
    %c0_i32 = arith.constant 0 : i32
    %c0_i32_0 = arith.constant 0 : i32
    return %arg0, %c0_i32 : i32, i32
  }
  func.func @transform_3(%arg0: i32) -> (i32, i32) {
    %c0_i32 = arith.constant 0 : i32
    %c0_i32_0 = arith.constant 0 : i32
    return %arg0, %c0_i32 : i32, i32
  }
}

</mosaic_0001>

<llo_original>
// kernel: tpu_custom_call.1
$region0: #{tpu_custom_call.1}
  #allocation0 [shape = 'u32[]', space=smem, size = 0x4, offset = 0x4, fixed_abs, tag = 'smem constant byte address 0x4 - core index']
  #allocation1 [shape = 'u32[144,128]{1,0:T(1,128)}', space=vmem, size = 0x12000, scoped, tag = 'internal scratch']
  %s0 = inlined_call_operand.hbm [shape: f32[64,32], index: 0, kind: input, shape index: {}]
  %s1 = inlined_call_operand.hbm [shape: f32[32,128], index: 1, kind: input, shape index: {}]
  %s2 = inlined_call_operand.hbm [shape: f32[64,1], index: 2, kind: input, shape index: {}]
  %s3 = inlined_call_operand.hbm [shape: f32[64,128], index: 3, kind: output, shape index: {}]
  %s4 = sld [smem:[#allocation0]]
  $region34: #{tpu_custom_call.1} parent=0
    _
  %s6 = ssub.s32 1, %s4
  %s7 = scalar_select 0, %s6, %s4
  $region1: #{tpu_custom_call.1} parent=0
    #allocation2 [shape = 'u8[32768]{0}', space=vmem, size = 0x8000, scoped, tag = 'input window, operand 0, single buffered']
    #allocation3 [shape = 's32[1]{0}', space=sflag, size = 0x4, scoped, tag = 'scoped memory for tpu_custom_call.1']
    #allocation4 [shape = 's32[1]{0}', space=sflag, size = 0x4, scoped, tag = 'scoped memory for tpu_custom_call.1']
    #allocation5 [shape = 'u8[16384]{0}', space=vmem, size = 0x4000, scoped, tag = 'input window, operand 1, single buffered']
    #allocation6 [shape = 's32[1]{0}', space=sflag, size = 0x4, scoped, tag = 'scoped memory for tpu_custom_call.1']
    #allocation7 [shape = 'u8[32768]{0}', space=vmem, size = 0x8000, scoped, tag = 'input window, operand 2, single buffered']
    #allocation8 [shape = 'u8[32768]{0}', space=vmem, size = 0x8000, scoped, tag = 'output window, operand 0, single buffered']
    %8 = vsyncpa [#allocation3], 0
    %9 = vsyncpa [#allocation6], 0
    %10 = vsyncpa [#allocation4], 0
    // Predicated region
    $region2: #{tpu_custom_call.1} parent=1 // pred_check
      _
    $region3: #{tpu_custom_call.1} parent=1 // pred_check_branch
      %12 = sbr.rel (0) target = $region5
    $region4: #{tpu_custom_call.1} parent=1 // pred_region
      %s14 = ssub.s32 1024, 1024
      %15 = vsyncadd [#allocation3], %s14
      %s16 = sshll.u32 [#allocation2], 4
      %s17 = int_to_ptr.vmem [resolvable:$true] %s16
      %22 = dma.hbm_to_vmem [thread:$0]  %s0, 1024, %s17, [#allocation3], 128, 128, 8
    $region5: #{tpu_custom_call.1} parent=1 // pred_fallthru
      _
    // Predicated region
    $region6: #{tpu_custom_call.1} parent=1 // pred_check
      _
    $region7: #{tpu_custom_call.1} parent=1 // pred_check_branch
      %24 = sbr.rel (0) target = $region9
    $region8: #{tpu_custom_call.1} parent=1 // pred_region
      %s26 = ssub.s32 512, 512
      %27 = vsyncadd [#allocation6], %s26
      %s28 = sshll.u32 [#allocation5], 4
      %s29 = int_to_ptr.vmem [resolvable:$true] %s28
      %34 = dma.hbm_to_vmem [thread:$0]  %s1, 512, %s29, [#allocation6], 128, 128, 8
    $region9: #{tpu_custom_call.1} parent=1 // pred_fallthru
      _
    // Predicated region
    $region10: #{tpu_custom_call.1} parent=1 // pred_check
      _
    $region11: #{tpu_custom_call.1} parent=1 // pred_check_branch
      %36 = sbr.rel (0) target = $region13
    $region12: #{tpu_custom_call.1} parent=1 // pred_region
      %s38 = ssub.s32 1024, 1024
      %39 = vsyncadd [#allocation6], %s38
      %s40 = sshll.u32 [#allocation7], 4
      %s41 = int_to_ptr.vmem [resolvable:$true] %s40
      %46 = dma.hbm_to_vmem [thread:$0]  %s2, 1024, %s41, [#allocation6], 128, 128, 8
    $region13: #{tpu_custom_call.1} parent=1 // pred_fallthru
      _
    // Predicated region
    $region14: #{tpu_custom_call.1} parent=1 // pred_check
      _
    $region15: #{tpu_custom_call.1} parent=1 // pred_check_branch
      %48 = sbr.rel (0) target = $region17
    $region16: #{tpu_custom_call.1} parent=1 // pred_region
      %49 = dma.done [#allocation3], 1024
    $region17: #{tpu_custom_call.1} parent=1 // pred_fallthru
      _
    // Predicated region
    $region18: #{tpu_custom_call.1} parent=1 // pred_check
      _
    $region19: #{tpu_custom_call.1} parent=1 // pred_check_branch
      %51 = sbr.rel (0) target = $region21
    $region20: #{tpu_custom_call.1} parent=1 // pred_region
      %52 = dma.done [#allocation6], 512
    $region21: #{tpu_custom_call.1} parent=1 // pred_fallthru
      _
    // Predicated region
    $region22: #{tpu_custom_call.1} parent=1 // pred_check
      _
    $region23: #{tpu_custom_call.1} parent=1 // pred_check_branch
      %54 = sbr.rel (0) target = $region25
    $region24: #{tpu_custom_call.1} parent=1 // pred_region
      %55 = dma.done [#allocation6], 1024
    $region25: #{tpu_custom_call.1} parent=1 // pred_fallthru
      _
    %v56 = vld [vmem:[#allocation2] sm:$0xff]
    %v57 = vld [vmem:[#allocation2 + $0x8] sm:$0xff]
    %v58 = vld [vmem:[#allocation2 + $0x10] sm:$0xff]
    %v59 = vld [vmem:[#allocation2 + $0x18] sm:$0xff]
    %v60 = vld [vmem:[#allocation2 + $0x20] sm:$0xff]
    %v61 = vld [vmem:[#allocation2 + $0x28] sm:$0xff]
    %v62 = vld [vmem:[#allocation2 + $0x30] sm:$0xff]
    %v63 = vld [vmem:[#allocation2 + $0x38] sm:$0xff]
    %v64 = vld [vmem:[#allocation5] sm:$0xff]
    %v65 = vld [vmem:[#allocation5 + $0x8] sm:$0xff]
    %v66 = vld [vmem:[#allocation5 + $0x10] sm:$0xff]
    %v67 = vld [vmem:[#allocation5 + $0x18] sm:$0xff]
    %vm68 = vcmask 261120
    %v70 = vsel %vm68, %v56, 0
    %v73 = vsel %vm68, %v57, 0
    %v76 = vsel %vm68, %v58, 0
    %v79 = vsel %vm68, %v59, 0
    %v82 = vsel %vm68, %v60, 0
    %v85 = vsel %vm68, %v61, 0
    %v88 = vsel %vm68, %v62, 0
    %v91 = vsel %vm68, %v63, 0
    %93 = vmatprep.subr.mxu0 0.0
    %94 = vmatpush1.msra.mxu0 %v64
    %95 = vmatprep.subr.mxu0 0.0
    %96 = vmatpush1.msra.mxu0 %v65
    %97 = vmatprep.subr.mxu0 0.0
    %98 = vmatpush1.msra.mxu0 %v66
    %99 = vmatprep.subr.mxu0 0.0
    %100 = vmatpush1.msra.mxu0 %v67
    %101 = vmatprep.subr.mxu0 0.0
    %102 = vmatpush1.msra.mxu0 0.0
    %103 = vmatprep.subr.mxu0 0.0
    %104 = vmatpush1.msra.mxu0 0.0
    %105 = vmatprep.subr.mxu0 0.0
    %106 = vmatpush1.msra.mxu0 0.0
    %107 = vmatprep.subr.mxu0 0.0
    %108 = vmatpush1.msra.mxu0 0.0
    %109 = vmatprep.subr.mxu0 0.0
    %110 = vmatpush1.msra.mxu0 0.0
    %111 = vmatprep.subr.mxu0 0.0
    %112 = vmatpush1.msra.mxu0 0.0
    %113 = vmatprep.subr.mxu0 0.0
    %114 = vmatpush1.msra.mxu0 0.0
    %115 = vmatprep.subr.mxu0 0.0
    %116 = vmatpush1.msra.mxu0 0.0
    %117 = vmatprep.subr.mxu0 0.0
    %118 = vmatpush1.msra.mxu0 0.0
    %119 = vmatprep.subr.mxu0 0.0
    %120 = vmatpush1.msra.mxu0 0.0
    %121 = vmatprep.subr.mxu0 0.0
    %122 = vmatpush1.msra.mxu0 0.0
    %123 = vmatprep.subr.mxu0 0.0
    %124 = vmatpush1.msra.mxu0 0.0
    %125 = vmatprep.subr.mxu0 0.0
    %126 = vmatpush1.msra.mxu0 0.0
    %127 = vmatprep.subr.mxu0 0.0
    %128 = vmatpush1.msra.mxu0 0.0
    %129 = vmatprep.subr.mxu0 0.0
    %130 = vmatpush1.msra.mxu0 0.0
    %131 = vmatprep.subr.mxu0 0.0
    %132 = vmatpush1.msra.mxu0 0.0
    %133 = vmatprep.subr.mxu0 0.0
    %134 = vmatpush1.msra.mxu0 0.0
    %135 = vmatprep.subr.mxu0 0.0
    %136 = vmatpush1.msra.mxu0 0.0
    %137 = vmatprep.subr.mxu0 0.0
    %138 = vmatpush1.msra.mxu0 0.0
    %139 = vmatprep.subr.mxu0 0.0
    %140 = vmatpush1.msra.mxu0 0.0
    %141 = vmatprep.subr.mxu0 0.0
    %142 = vmatpush1.msra.mxu0 0.0
    %143 = vmatprep.subr.mxu0 0.0
    %144 = vmatpush1.msra.mxu0 0.0
    %145 = vmatprep.subr.mxu0 0.0
    %146 = vmatpush1.msra.mxu0 0.0
    %147 = vmatprep.subr.mxu0 0.0
    %148 = vmatpush1.msra.mxu0 0.0
    %149 = vmatprep.subr.mxu0 0.0
    %150 = vmatpush1.msra.mxu0 0.0
    %151 = vmatprep.subr.mxu0 0.0
    %152 = vmatpush1.msra.mxu0 0.0
    %153 = vmatprep.subr.mxu0 0.0
    %154 = vmatpush1.msra.mxu0 0.0
    %155 = vmatprep.subr.mxu0 0.0
    %156 = vmatpush1.msra.mxu0 0.0
    %157 = vmatprep.mubr.f32.mxu0 0.0
    %158 = vmatmul.mubr.f32.gmra.mrb[0].mxu0 %v70
    %v159 = vpop.f32.mrb[0].mxu0
    %v160 = vadd.f32 0.0, %v159
    %v161 = vpop.f32.mrb[0].mxu0
    %162 = vmatprep.mubr.f32.mxu0 0.0
    %163 = vmatmul.mubr.f32.gmra.mrb[0].mxu0 %v73
    %v164 = vpop.f32.mrb[0].mxu0
    %v165 = vadd.f32 0.0, %v164
    %v166 = vpop.f32.mrb[0].mxu0
    %167 = vmatprep.mubr.f32.mxu0 0.0
    %168 = vmatmul.mubr.f32.gmra.mrb[0].mxu0 %v76
    %v169 = vpop.f32.mrb[0].mxu0
    %v170 = vadd.f32 0.0, %v169
    %v171 = vpop.f32.mrb[0].mxu0
    %172 = vmatprep.mubr.f32.mxu0 0.0
    %173 = vmatmul.mubr.f32.gmra.mrb[0].mxu0 %v79
    %v174 = vpop.f32.mrb[0].mxu0
    %v175 = vadd.f32 0.0, %v174
    %v176 = vpop.f32.mrb[0].mxu0
    %177 = vmatprep.mubr.f32.mxu0 0.0
    %178 = vmatmul.mubr.f32.gmra.mrb[0].mxu0 %v82
    %v179 = vpop.f32.mrb[0].mxu0
    %v180 = vadd.f32 0.0, %v179
    %v181 = vpop.f32.mrb[0].mxu0
    %182 = vmatprep.mubr.f32.mxu0 0.0
    %183 = vmatmul.mubr.f32.gmra.mrb[0].mxu0 %v85
    %v184 = vpop.f32.mrb[0].mxu0
    %v185 = vadd.f32 0.0, %v184
    %v186 = vpop.f32.mrb[0].mxu0
    %187 = vmatprep.mubr.f32.mxu0 0.0
    %188 = vmatmul.mubr.f32.gmra.mrb[0].mxu0 %v88
    %v189 = vpop.f32.mrb[0].mxu0
    %v190 = vadd.f32 0.0, %v189
    %v191 = vpop.f32.mrb[0].mxu0
    %192 = vmatprep.mubr.f32.mxu0 0.0
    %193 = vmatmul.mubr.f32.gmra.mrb[0].mxu0 %v91
    %v194 = vpop.f32.mrb[0].mxu0
    %v195 = vadd.f32 0.0, %v194
    %v196 = vpop.f32.mrb[0].mxu0
    %197 = vdwg.mxu0
    %v198 = vld [vmem:[#allocation7] sm:$0xff]
    %v199 = vld [vmem:[#allocation7 + $0x8] sm:$0xff]
    %v200 = vld [vmem:[#allocation7 + $0x10] sm:$0xff]
    %v201 = vld [vmem:[#allocation7 + $0x18] sm:$0xff]
    %v202 = vld [vmem:[#allocation7 + $0x20] sm:$0xff]
    %v203 = vld [vmem:[#allocation7 + $0x28] sm:$0xff]
    %v204 = vld [vmem:[#allocation7 + $0x30] sm:$0xff]
    %v205 = vld [vmem:[#allocation7 + $0x38] sm:$0xff]
    %207 = vset.pattern.permute.xlu0 0
    %208 = vperm.xlu0 %207, %v198
    %v209 = vpop.permute.xlu0 %208
    %212 = vset.pattern.permute.xlu0 0
    %213 = vperm.xlu0 %212, %v199
    %v214 = vpop.permute.xlu0 %213
    %217 = vset.pattern.permute.xlu0 0
    %218 = vperm.xlu0 %217, %v200
    %v219 = vpop.permute.xlu0 %218
    %222 = vset.pattern.permute.xlu0 0
    %223 = vperm.xlu0 %222, %v201
    %v224 = vpop.permute.xlu0 %223
    %227 = vset.pattern.permute.xlu0 0
    %228 = vperm.xlu0 %227, %v202
    %v229 = vpop.permute.xlu0 %228
    %232 = vset.pattern.permute.xlu0 0
    %233 = vperm.xlu0 %232, %v203
    %v234 = vpop.permute.xlu0 %233
    %237 = vset.pattern.permute.xlu0 0
    %238 = vperm.xlu0 %237, %v204
    %v239 = vpop.permute.xlu0 %238
    %242 = vset.pattern.permute.xlu0 0
    %243 = vperm.xlu0 %242, %v205
    %v244 = vpop.permute.xlu0 %243
    %v246 = vmul.f32 %v160, %v209
    %v247 = vmul.f32 %v165, %v214
    %v248 = vmul.f32 %v170, %v219
    %v249 = vmul.f32 %v175, %v224
    %v250 = vmul.f32 %v180, %v229
    %v251 = vmul.f32 %v185, %v234
    %v252 = vmul.f32 %v190, %v239
    %v253 = vmul.f32 %v195, %v244
    %254 = vst [vmem:[#allocation8] sm:$0xff] %v246
    %255 = vst [vmem:[#allocation8 + $0x8] sm:$0xff] %v247
    %256 = vst [vmem:[#allocation8 + $0x10] sm:$0xff] %v248
    %257 = vst [vmem:[#allocation8 + $0x18] sm:$0xff] %v249
    %258 = vst [vmem:[#allocation8 + $0x20] sm:$0xff] %v250
    %259 = vst [vmem:[#allocation8 + $0x28] sm:$0xff] %v251
    %260 = vst [vmem:[#allocation8 + $0x30] sm:$0xff] %v252
    %261 = vst [vmem:[#allocation8 + $0x38] sm:$0xff] %v253
    // Predicated region
    $region26: #{tpu_custom_call.1} parent=1 // pred_check
      _
    $region27: #{tpu_custom_call.1} parent=1 // pred_check_branch
      %263 = sbr.rel (0) target = $region29
    $region28: #{tpu_custom_call.1} parent=1 // pred_region
      %s265 = ssub.s32 1024, 1024
      %266 = vsyncadd [#allocation4], %s265
      %s267 = sshll.u32 [#allocation8], 4
      %s268 = int_to_ptr.vmem [resolvable:$true] %s267
      %273 = dma.vmem_to_hbm [thread:$0]  %s268, 1024, %s3, [#allocation4], 128, 128, 8
    $region29: #{tpu_custom_call.1} parent=1 // pred_fallthru
      _
    // Predicated region
    $region30: #{tpu_custom_call.1} parent=1 // pred_check
      _
    $region31: #{tpu_custom_call.1} parent=1 // pred_check_branch
      %275 = sbr.rel (0) target = $region33
    $region32: #{tpu_custom_call.1} parent=1 // pred_region
      %276 = dma.done [#allocation4], 1024
    $region33: #{tpu_custom_call.1} parent=1 // pred_fallthru
      _
    %277 = vsyncpa [#allocation3], 1
    %278 = vsyncpa [#allocation6], 1
    %279 = vsyncpa [#allocation4], 1

</llo_original>
